<compile_context>
chip_gen: v5e
topology: v5e:2x2
jax: 0.10.0
libtpu: 0.0.40
codegen_flags: <defaults>
</compile_context>

<pallas_src>
import jax
import jax.numpy as jnp
from jax.experimental import pallas as pl
from jax.experimental.pallas import tpu as pltpu


def _i1_to_f32_kernel(x_ref, o_ref):
    # Trivial cast, fully hidden under the DMA; keep the body minimal.
    o_ref[...] = x_ref[...].astype(jnp.float32)


# Double-buffered footprint per tile element: bool in (1 B) + f32 out (4 B).
_PER_ELEM_VMEM_BYTES = 2 * (1 + 4)
# Sublane multiple that satisfies both the f32 (8) and 8-bit/bool (32) rules.
_SUB = 32


def _vmem_budget_bytes():
    """Generation-aware scoped-VMEM budget (headroom for Mosaic scratch)."""
    try:
        cap = int(pltpu.get_tpu_info().vmem_capacity_bytes)
    except Exception:
        cap = 64 << 20  # conservative: assume smallest (v7x per-TC) VMEM
    # Never request more than 64 MiB (plenty on 128 MiB parts); always leave
    # >= 16 MiB headroom on 64 MiB (v7x) parts.
    return max(16 << 20, min(cap - (16 << 20), 64 << 20))


def _choose_tiles(m, n, max_elems):
    """Pick (tm, tn): prefer full rows (one contiguous DMA per block)."""
    if n * _SUB <= max_elems:
        tn = n  # full-row blocks: contiguous HBM transfers, unmasked stores
    else:
        tn = max(128, min(n, max_elems // _SUB) // 128 * 128)
    tm = min(m, max(_SUB, (max_elems // tn) // _SUB * _SUB))
    return tm, tn


def _split_for_two_cores(m, n, tm, tn):
    """If the grid collapsed to one step, split one parallel axis so both
    TensorCores on multi-core parts (v7x) participate."""
    if pl.cdiv(m, tm) * pl.cdiv(n, tn) > 1:
        return tm, tn
    if m >= 2 * _SUB:
        tm = max(_SUB, ((m // 2) + _SUB - 1) // _SUB * _SUB)
    elif n >= 256:
        tn = max(128, ((n // 2) + 127) // 128 * 128)
    return tm, tn


def _lane_dense_view(m, n):
    """Lane-dense reshape target for a contiguous (m, n) problem, if the
    original last dim would force masked stores / strided DMA."""
    if n % 128 == 0 and n >= 512:
        return None
    total = m * n
    for lanes in (4096, 2048, 1024, 512, 256, 128):
        if lanes != n and total % lanes == 0:
            return total // lanes, lanes
    return None


def i1_to_f32(x):
    """Pallas equivalent of `x.to(torch.float32)` for a 2-D bool tensor."""
    assert x.ndim == 2 and x.dtype == jnp.bool_, (x.shape, x.dtype)
    m, n = x.shape
    if m * n == 0:
        return jnp.zeros((m, n), jnp.float32)

    # Free reshape (contiguous array) to a lane-dense shape when N is awkward.
    view = _lane_dense_view(m, n)
    xr = x.reshape(view) if view is not None else x
    mr, nr = xr.shape

    budget = _vmem_budget_bytes()
    max_elems = (budget * 9 // 10) // _PER_ELEM_VMEM_BYTES  # keep slack
    tm, tn = _choose_tiles(mr, nr, max_elems)
    tm, tn = _split_for_two_cores(mr, nr, tm, tn)
    grid = (pl.cdiv(mr, tm), pl.cdiv(nr, tn))

    out = pl.pallas_call(
        _i1_to_f32_kernel,
        out_shape=jax.ShapeDtypeStruct((mr, nr), jnp.float32),
        grid_spec=pltpu.PrefetchScalarGridSpec(
            num_scalar_prefetch=0,
            grid=grid,
            in_specs=[pl.BlockSpec((tm, tn), lambda i, j: (i, j))],
            out_specs=pl.BlockSpec((tm, tn), lambda i, j: (i, j)),
        ),
        compiler_params=pltpu.CompilerParams(
            dimension_semantics=("parallel", "parallel"),
            vmem_limit_bytes=budget,
        ),
        cost_estimate=pl.CostEstimate(
            flops=0, transcendentals=0, bytes_accessed=5 * m * n),
    )(xr)

    if view is not None:
        out = out.reshape((m, n))
    return out


if __name__ == "__main__":
    key = jax.random.PRNGKey(0)

    # Small [-1, -1] bool input consistent with the module's annotation.
    M, N = 16, 256
    x = jax.random.bernoulli(key, p=0.5, shape=(M, N))  # dtype=bool
    assert x.dtype == jnp.bool_

    out = jax.block_until_ready(i1_to_f32(x))
    ref = x.astype(jnp.float32)  # torch: True -> 1.0, False -> 0.0
    assert out.shape == (M, N) and out.dtype == jnp.float32
    assert bool(jnp.array_equal(out, ref)), "mismatch vs reference bool->f32 cast"

    # Also exercise the non-lane-dense fallback path (full-dim blocks).
    x2 = jax.random.bernoulli(jax.random.PRNGKey(1), p=0.3, shape=(24, 56))
    out2 = jax.block_until_ready(i1_to_f32(x2))
    assert bool(jnp.array_equal(out2, x2.astype(jnp.float32)))

    print("KERNEL_OK")
</pallas_src>

<mosaic_0001>
module attributes {stable_mosaic.version = 11 : i64} {
  func.func @_i1_to_f32_kernel(%arg0: i32, %arg1: i32, %arg2: memref<1x2048xi32, #tpu.memory_space<vmem>>, %arg3: memref<1x2048xf32, #tpu.memory_space<vmem>>) attributes {dimension_semantics = [#tpu.dimension_semantics<parallel>, #tpu.dimension_semantics<parallel>], iteration_bounds = array<i64: 1, 2>, scalar_prefetch = 0 : i64, scratch_operands = 0 : i64, tpu.core_type = #tpu.core_type<tc>, window_params = [{transform_indices = @transform_0, window_bounds = array<i64: 1, 2048>}, {transform_indices = @transform_1, window_bounds = array<i64: 1, 2048>}]} {
    %c0 = arith.constant 0 : index
    %c0_0 = arith.constant 0 : index
    %0 = vector.load %arg2[%c0, %c0_0] : memref<1x2048xi32, #tpu.memory_space<vmem>>, vector<1x2048xi32>
    %cst = arith.constant dense<0> : vector<1x2048xi32>
    %1 = arith.cmpi ne, %0, %cst : vector<1x2048xi32>
    %2 = arith.extui %1 : vector<1x2048xi1> to vector<1x2048xi32>
    %3 = arith.sitofp %2 : vector<1x2048xi32> to vector<1x2048xf32>
    %c0_1 = arith.constant 0 : index
    %c0_2 = arith.constant 0 : index
    %4 = vector.load %arg3[%c0_1, %c0_2] : memref<1x2048xf32, #tpu.memory_space<vmem>>, vector<1x2048xf32>
    tpu.vector_store %arg3[%c0_1, %c0_2], %3 {strides = array<i32>} : memref<1x2048xf32, #tpu.memory_space<vmem>>, vector<1x2048xf32>,
    return
  }
  func.func @transform_0(%arg0: i32, %arg1: i32) -> (i32, i32) {
    %c0_i32 = arith.constant 0 : i32
    return %arg0, %arg1 : i32, i32
  }
  func.func @transform_1(%arg0: i32, %arg1: i32) -> (i32, i32) {
    %c0_i32 = arith.constant 0 : i32
    return %arg0, %arg1 : i32, i32
  }
}

</mosaic_0001>

<llo_original>
// kernel: tpu_custom_call.1
$region0: #{tpu_custom_call.1}
  #allocation0 [shape = 'u32[]', space=smem, size = 0x4, offset = 0x4, fixed_abs, tag = 'smem constant byte address 0x4 - core index']
  #allocation1 [shape = 'u32[72,128]{1,0:T(1,128)}', space=vmem, size = 0x9000, scoped, tag = 'internal scratch']
  %s0 = inlined_call_operand.vmem [shape: s32[1,4096], index: 0, kind: input, shape index: {}]
  %s1 = inlined_call_operand.hbm [shape: f32[1,4096], index: 1, kind: output, shape index: {}]
  %s2 = sld [smem:[#allocation0]]
  $region37: #{tpu_custom_call.1} parent=0
    _
  %s4 = ssub.s32 1, %s2
  %s5 = scalar_select 0, %s4, %s2
  $region1: #{tpu_custom_call.1} parent=0
    #allocation2 [shape = 'u8[16384]{0}', space=vmem, size = 0x4000, scoped, tag = 'output window, operand 0']
    #allocation3 [shape = 's32[2]{0}', space=sflag, size = 0x8, scoped, tag = 'scoped memory for tpu_custom_call.1']
    %6 = vsyncpa [#allocation3], 0
    %s7 = scalar_lea.sflag [#allocation3], 1
    %8 = vsyncpa %s7, 0
    loop: start=0, step=1, limit=4
    $region2: #{tpu_custom_call.1} parent=1 // loop_pre_header
      _
    $region3: #{tpu_custom_call.1} parent=1 // loop_header
      %s10 = sphi 0, %s14
      %p11 = scmp.ge.s32.totalorder %s10, 4
      %s17 = sphi 0, %s29
      %s18 = sphi 0, %s25
      %s19 = sphi 0, %s17
      %s20 = sphi 0, %s18
      %s21 = sphi 0, %s19
      %s22 = sphi 0, %s20
      %s34 = sphi 0, %s36
      %s37 = sphi 0, %s34
      %s38 = sphi 0, %s37
      %s54 = sphi 0, %s38
      %s62 = sphi 0, %s64
      %s65 = sphi 0, %s62
      %s66 = sphi 0, %s65
      %s82 = sphi 0, %s66
    $region4: #{tpu_custom_call.1} parent=1 // loop_header_branch
      %13 = sbr.rel (%p11) target = $region8
    $region5: #{tpu_custom_call.1} parent=1 // loop_body
      %s15 = ssub.s32 %s10, 1
      %s16 = ssub.s32 %s10, 2
      %s23 = sadd.s32 1, %s18
      %p24 = scmp.ge.s32.totalorder %s23, 2
      %s25 = scalar_select %p24, 0, %s23
      %s26 = sadd.s32 1, %s17
      %s27 = scalar_select %p24, %s26, %s17
      %p28 = scmp.ge.s32.totalorder %s27, 1
      %s29 = scalar_select %p28, 0, %s27
      %s30 = ssub.s32 %s17, %s29
      %s31 = ssub.s32 %s18, %s25
      %s32 = sor.u32 %s30, %s31
      %p33 = scmp.eq.s32.totalorder %s32, 0
      %s35 = sadd.s32 %s34, 1
      %s36 = scalar_select %p33, %s34, %s35
      %p39 = pneg %p33
      %p40 = scmp.eq.s32.totalorder %s10, 1
      %p41 = por %p39, %p40
      %p42 = scmp.ne.s32.totalorder %s34, %s37
      %p43 = scmp.eq.s32.totalorder %s10, 0
      %p44 = por %p42, %p43
      %p45 = scmp.ne.s32.totalorder %s34, %s37
      %p46 = scmp.eq.s32.totalorder %s15, 1
      %p47 = por %p45, %p46
      %p48 = scmp.ne.s32.totalorder %s37, %s38
      %p49 = scmp.eq.s32.totalorder %s15, 0
      %p50 = por %p48, %p49
      %p51 = scmp.ne.s32.totalorder %s37, %s38
      %p52 = scmp.eq.s32.totalorder %s16, 1
      %p53 = por %p51, %p52
      %p55 = scmp.ne.s32.totalorder %s38, %s54
      %p56 = scmp.eq.s32.totalorder %s16, 0
      %p57 = por %p55, %p56
      %s58 = ssub.s32 %s17, %s29
      %s59 = ssub.s32 %s18, %s25
      %s60 = sor.u32 %s58, %s59
      %p61 = scmp.eq.s32.totalorder %s60, 0
      %s63 = sadd.s32 %s62, 1
      %s64 = scalar_select %p61, %s62, %s63
      %p67 = pneg %p61
      %p68 = scmp.eq.s32.totalorder %s10, 1
      %p69 = por %p67, %p68
      %p70 = scmp.ne.s32.totalorder %s62, %s65
      %p71 = scmp.eq.s32.totalorder %s10, 0
      %p72 = por %p70, %p71
      %p73 = scmp.ne.s32.totalorder %s62, %s65
      %p74 = scmp.eq.s32.totalorder %s15, 1
      %p75 = por %p73, %p74
      %p76 = scmp.ne.s32.totalorder %s65, %s66
      %p77 = scmp.eq.s32.totalorder %s15, 0
      %p78 = por %p76, %p77
      %p79 = scmp.ne.s32.totalorder %s65, %s66
      %p80 = scmp.eq.s32.totalorder %s16, 1
      %p81 = por %p79, %p80
      %p83 = scmp.ne.s32.totalorder %s66, %s82
      %p84 = scmp.eq.s32.totalorder %s16, 0
      %p85 = por %p83, %p84
      %p86 = scmp.le.s32.totalorder 1, %s10
      %p87 = scmp.lt.s32.totalorder %s10, 3
      %p88 = pnand %p86, %p87
      %p89 = pneg %p88
      // Predicated region
      $region9: #{tpu_custom_call.1} parent=5 // pred_check
        _
      $region10: #{tpu_custom_call.1} parent=5 // pred_check_branch
        %91 = sbr.rel (%p88) target = $region12
      $region11: #{tpu_custom_call.1} parent=5 // pred_region
        %s92 = ssub.s32 %s10, 1
      $region12: #{tpu_custom_call.1} parent=5 // pred_fallthru
        _
      %p93 = scmp.lt.s32.totalorder %s10, 2
      // Predicated region
      $region13: #{tpu_custom_call.1} parent=5 // pred_check
        %p94 = pneg %p93
      $region14: #{tpu_custom_call.1} parent=5 // pred_check_branch
        %96 = sbr.rel (%p94) target = $region16
      $region15: #{tpu_custom_call.1} parent=5 // pred_region
        // Predicated region
        $region17: #{tpu_custom_call.1} parent=15 // pred_check
          %p97 = pneg %p44
        $region18: #{tpu_custom_call.1} parent=15 // pred_check_branch
          %99 = sbr.rel (%p97) target = $region20
        $region19: #{tpu_custom_call.1} parent=15 // pred_region
          %s100 = smul.u32 16, %s18
          %p101 = scmp.lt.s32.totalorder %s17, 0
          %s102 = scalar_select %p101, %s17, 0
          %p103 = scmp.lt.s32.totalorder %s100, 31
          %s104 = scalar_select %p103, %s100, 31
          %s105 = smul.addr %s102, 32
          %s106 = sadd.s32 %s104, %s105
          %s107 = scalar_lea.vmem %s0, %s106
          %s108 = smul.u32 16, %s18
        $region20: #{tpu_custom_call.1} parent=15 // pred_fallthru
          _
      $region16: #{tpu_custom_call.1} parent=5 // pred_fallthru
        _
      %p109 = scmp.le.s32.totalorder 1, %s10
      %p110 = scmp.lt.s32.totalorder %s10, 3
      %p111 = pnand %p109, %p110
      %p112 = pneg %p111
      // Predicated region
      $region21: #{tpu_custom_call.1} parent=5 // pred_check
        _
      $region22: #{tpu_custom_call.1} parent=5 // pred_check_branch
        %114 = sbr.rel (%p111) target = $region24
      $region23: #{tpu_custom_call.1} parent=5 // pred_region
        %s115 = ssub.s32 %s10, 1
        %s116 = smul.u32 16, %s20
        %p117 = scmp.lt.s32.totalorder %s19, 0
        %s118 = scalar_select %p117, %s19, 0
        %p119 = scmp.lt.s32.totalorder %s116, 31
        %s120 = scalar_select %p119, %s116, 31
        %s121 = smul.addr %s118, 32
        %s122 = sadd.s32 %s120, %s121
        %s123 = scalar_lea.vmem %s0, %s122
        %p124 = pneg %p50
        %p125 = pneg %p47
        %p126 = pneg %p78
        %p127 = pneg %p75
        %s128 = sand.u32 %s65, 1
        %s129 = scalar_lea.sflag [#allocation3], %s128
        %s130 = sand.u32 %s65, 1
        %s131 = smul.addr %s130, 16
        %s132 = scalar_lea.vmem [#allocation2], %s131
        %s133 = smul.u32 16, %s20
        %p134 = scmp.lt.s32.totalorder %s19, 0
        %s135 = scalar_select %p134, %s19, 0
        %p136 = scmp.lt.s32.totalorder %s133, 31
        %s137 = scalar_select %p136, %s133, 31
        %s138 = smul.addr %s135, 32
        %s139 = sadd.s32 %s137, %s138
        %s140 = scalar_lea.vmem %s0, %s139
        %s141 = smul.u32 16, %s20
        %s142 = smul.u32 16, %s20
        %v143 = vld [vmem:[%s140] sm:$0xff]
        %v144 = vld [vmem:[%s140 + $0x8] sm:$0xff]
        %vm145 = vcmp.ne.s32.totalorder %v143, 0
        %vm146 = vcmp.ne.s32.totalorder %v144, 0
        %v147 = vsel %vm145, 1, 0
        %v148 = vsel %vm146, 1, 0
        %v149 = vcvt.s32.f32 %v147
        %v150 = vcvt.s32.f32 %v148
        %151 = vst [vmem:[%s132] sm:$0xff] %v149
        %152 = vst [vmem:[%s132 + $0x8] sm:$0xff] %v150
        %s153 = sand.u32 %s65, 1
        %s154 = scalar_lea.sflag [#allocation3], %s153
        %s155 = sand.u32 %s65, 1
        %s156 = smul.addr %s155, 16
        %s157 = scalar_lea.vmem [#allocation2], %s156
        // Predicated region
        $region25: #{tpu_custom_call.1} parent=23 // pred_check
          %p158 = pneg %p75
        $region26: #{tpu_custom_call.1} parent=23 // pred_check_branch
          %160 = sbr.rel (%p158) target = $region28
        $region27: #{tpu_custom_call.1} parent=23 // pred_region
          %s161 = smul.u32 16, %s20
          %163 = vsyncadd %s154, 0
          %s164 = smul.addr %s19, 32
          %s165 = sadd.s32 %s161, %s164
          %s166 = scalar_lea.hbm %s1, %s165
          %s168 = sshll.u32 %s157, 4
          %s169 = int_to_ptr.vmem [resolvable:$true] %s168
          %s170 = sshll.u32 %s166, 4
          %s171 = int_to_ptr.hbm [resolvable:$true] %s170
          %173 = dma.vmem_to_hbm [thread:$0]  %s169, 256, %s171, %s154
        $region28: #{tpu_custom_call.1} parent=23 // pred_fallthru
          _
      $region24: #{tpu_custom_call.1} parent=5 // pred_fallthru
        _
      %p174 = scmp.le.s32.totalorder 2, %s10
      // Predicated region
      $region29: #{tpu_custom_call.1} parent=5 // pred_check
        %p175 = pneg %p174
      $region30: #{tpu_custom_call.1} parent=5 // pred_check_branch
        %177 = sbr.rel (%p175) target = $region32
      $region31: #{tpu_custom_call.1} parent=5 // pred_region
        %s178 = ssub.s32 %s10, 2
        // Predicated region
        $region33: #{tpu_custom_call.1} parent=31 // pred_check
          %p179 = pneg %p81
        $region34: #{tpu_custom_call.1} parent=31 // pred_check_branch
          %181 = sbr.rel (%p179) target = $region36
        $region35: #{tpu_custom_call.1} parent=31 // pred_region
          %s182 = sand.u32 %s66, 1
          %s183 = scalar_lea.sflag [#allocation3], %s182
          %s184 = sand.u32 %s66, 1
          %s185 = smul.addr %s184, 16
          %s186 = scalar_lea.vmem [#allocation2], %s185
          %188 = dma.done %s183, 256
        $region36: #{tpu_custom_call.1} parent=31 // pred_fallthru
          _
      $region32: #{tpu_custom_call.1} parent=5 // pred_fallthru
        _
    $region6: #{tpu_custom_call.1} parent=1 // loop_footer
      %s14 = sadd.s32 1, %s10
    $region7: #{tpu_custom_call.1} parent=1 // loop_footer_branch
      %9 = sbr.rel target = $region3
    $region8: #{tpu_custom_call.1} parent=1 // loop_exit
      _
    %189 = vsyncpa [#allocation3], 1
    %s190 = scalar_lea.sflag [#allocation3], 1
    %191 = vsyncpa %s190, 1

</llo_original>
